<compile_context>
chip_gen: v7x
topology: tpu7x:2x2x1
jax: 0.10.0
libtpu: 0.0.40
codegen_flags: <defaults>
</compile_context>

<pallas_src>
import jax
import jax.numpy as jnp
from jax.experimental import pallas as pl
from jax.experimental.pallas import tpu as pltpu

BN_EPS = 1e-5


def non_local_kernel(x_ref, pvec_ref, bias_ref, o_ref):
    x = x_ref[...]                      # (B, C, N) float32, N on lanes
    n = x.shape[-1]                     # N = H * W (static)

    wg = pvec_ref[0]                    # (C, 1) -- C on sublanes
    wt = pvec_ref[1]
    wp = pvec_ref[2]
    eff_w = pvec_ref[3]
    eff_b = pvec_ref[4]

    bg = bias_ref[0]                    # f32 scalars from SMEM
    bt = bias_ref[1]
    bp = bias_ref[2]

    # g / theta / phi: 1x1 convs C -> 1, i.e. channel contraction over the sublane axis.
    g = jnp.sum(x * wg, axis=1, keepdims=True) + bg        # (B, 1, N)
    theta = jnp.sum(x * wt, axis=1, keepdims=True) + bt    # (B, 1, N)
    phi = jnp.sum(x * wp, axis=1, keepdims=True) + bp      # (B, 1, N)

    # y = (theta @ phi^T / N) @ g  ==  theta * (phi . g) / N   (rank-1 simplification)
    s = jnp.sum(phi * g, axis=-1, keepdims=True)           # (B, 1, 1)
    y = theta * (s * (1.0 / n))                             # (B, 1, N)

    # fused W conv (1 -> C) + BatchNorm (inference) + residual; lane-dense store.
    o_ref[...] = (y * eff_w + eff_b + x).astype(o_ref.dtype)


def non_local_forward(x_nchw, prm):
    """x_nchw: (B, C, H, W) float32, PyTorch NCHW convention."""
    B, C, H, W = x_nchw.shape
    N = H * W
    x_bcn = x_nchw.reshape(B, C, N).astype(jnp.float32)     # contiguous reshape, no transpose

    # Fold W conv + BatchNorm2d (eval mode) into one per-channel scale and shift.
    inv_std = jax.lax.rsqrt(prm["var"].astype(jnp.float32) + BN_EPS)
    eff_w = prm["ww"] * prm["gamma"] * inv_std
    eff_b = (prm["bw"] - prm["mean"]) * prm["gamma"] * inv_std + prm["beta"]

    pvec = jnp.stack([prm["wg"], prm["wt"], prm["wp"], eff_w, eff_b], axis=0)
    pvec = pvec.astype(jnp.float32)[..., None]               # (5, C, 1)
    bias = jnp.stack([prm["bg"], prm["bt"], prm["bp"]]).astype(jnp.float32)   # (3,)

    out = pl.pallas_call(
        non_local_kernel,
        out_shape=jax.ShapeDtypeStruct((B, C, N), jnp.float32),
        grid=(1,),
        in_specs=[
            pl.BlockSpec((B, C, N), lambda i: (0, 0, 0)),          # x   (B, C, N)
            pl.BlockSpec((5, C, 1), lambda i: (0, 0, 0)),          # packed vector params
            pl.BlockSpec(memory_space=pltpu.MemorySpace.SMEM),     # conv biases (3,)
        ],
        out_specs=pl.BlockSpec((B, C, N), lambda i: (0, 0, 0)),
        compiler_params=pltpu.CompilerParams(dimension_semantics=("arbitrary",)),
    )(x_bcn, pvec, bias)

    return out.reshape(B, C, H, W)


def init_params(key, C):
    """Deterministic synthetic init mirroring the module's __init__ shapes."""
    ks = jax.random.split(key, 8)
    b_in = 1.0 / float(C) ** 0.5      # conv fan_in = C for g / theta / phi
    u = lambda k, shape, b: jax.random.uniform(k, shape, jnp.float32, -b, b)
    return dict(
        wg=u(ks[0], (C,), b_in), bg=u(ks[1], (), b_in),
        wt=u(ks[2], (C,), b_in), bt=u(ks[3], (), b_in),
        wp=u(ks[4], (C,), b_in), bp=u(ks[5], (), b_in),
        ww=u(ks[6], (C,), 1.0),  bw=u(ks[7], (C,), 1.0),    # W conv fan_in = 1
        gamma=jnp.zeros((C,), jnp.float32),   # nn.init.constant_(W[1].weight, 0.0)
        beta=jnp.zeros((C,), jnp.float32),    # nn.init.constant_(W[1].bias, 0.0)
        mean=jnp.zeros((C,), jnp.float32),    # BN running_mean (inference mode)
        var=jnp.ones((C,), jnp.float32),      # BN running_var  (inference mode)
    )


def reference_forward(x, prm):
    """Pure-JAX reference matching the PyTorch forward (BN in eval mode),
    materializing the full N x N f matrix (no rank-1 shortcut)."""
    B, C, H, W = x.shape
    N = H * W
    xf = x.reshape(B, C, N).astype(jnp.float32)
    g_x = jnp.einsum("c,bcn->bn", prm["wg"], xf) + prm["bg"]      # (B, N)
    th = jnp.einsum("c,bcn->bn", prm["wt"], xf) + prm["bt"]
    ph = jnp.einsum("c,bcn->bn", prm["wp"], xf) + prm["bp"]
    f_div = th[:, :, None] * ph[:, None, :] / N                    # (B, N, N)
    y = jnp.einsum("bnm,bm->bn", f_div, g_x)                       # (B, N)
    w_y = y[:, None, :] * prm["ww"][None, :, None] + prm["bw"][None, :, None]  # (B, C, N)
    w_y = (w_y - prm["mean"][None, :, None]) * jax.lax.rsqrt(prm["var"][None, :, None] + BN_EPS)
    w_y = w_y * prm["gamma"][None, :, None] + prm["beta"][None, :, None]
    return (w_y + xf).reshape(B, C, H, W)


if __name__ == "__main__":
    key = jax.random.PRNGKey(0)
    kx, kp, kt = jax.random.split(key, 3)
    B, C, H, W = 2, 4, 16, 16
    x = jax.random.normal(kx, (B, C, H, W), jnp.float32)
    prm = init_params(kp, C)

    # The module's __init__ zeros the BN affine params (so the W/BN branch outputs 0);
    # use nonzero BN params first so the whole g/theta/phi/y/W/BN/residual path is
    # actually exercised, then also check the faithful (gamma=beta=0) init.
    kt1, kt2, kt3, kt4 = jax.random.split(kt, 4)
    prm_test = dict(prm)
    prm_test["gamma"] = jax.random.normal(kt1, (C,), jnp.float32)
    prm_test["beta"] = jax.random.normal(kt2, (C,), jnp.float32)
    prm_test["mean"] = jax.random.normal(kt3, (C,), jnp.float32)
    prm_test["var"] = jax.random.uniform(kt4, (C,), jnp.float32, 0.5, 2.0)

    for p in (prm_test, prm):
        z = jax.block_until_ready(non_local_forward(x, p))
        z_ref = reference_forward(x, p)
        if not bool(jnp.allclose(z, z_ref, atol=1e-4, rtol=1e-4)):
            raise AssertionError("Pallas Non_local output mismatch vs reference")
    print("KERNEL_OK")
</pallas_src>

<mosaic_0001>
module attributes {stable_mosaic.version = 11 : i64} {
  func.func @non_local_kernel(%arg0: i32, %arg1: memref<2x4x256xf32, #tpu.memory_space<vmem>>, %arg2: memref<5x4x1xf32, #tpu.memory_space<vmem>>, %arg3: memref<3xf32, #tpu.memory_space<smem>>, %arg4: memref<2x4x256xf32, #tpu.memory_space<vmem>>) attributes {dimension_semantics = [#tpu.dimension_semantics<arbitrary>], iteration_bounds = array<i64: 1>, scalar_prefetch = 0 : i64, scratch_operands = 0 : i64, tpu.core_type = #tpu.core_type<tc>, window_params = [{pipeline_mode = #tpu.pipeline_mode<synchronous>, transform_indices = @transform_0, window_bounds = array<i64: 2, 4, 256>}, {pipeline_mode = #tpu.pipeline_mode<synchronous>, transform_indices = @transform_1, window_bounds = array<i64: 5, 4, 1>}, {transform_indices = @transform_2, window_bounds = array<i64: 3>}, {pipeline_mode = #tpu.pipeline_mode<synchronous>, transform_indices = @transform_3, window_bounds = array<i64: 2, 4, 256>}]} {
    %c0 = arith.constant 0 : index
    %c0_0 = arith.constant 0 : index
    %c0_1 = arith.constant 0 : index
    %0 = vector.load %arg1[%c0, %c0_0, %c0_1] : memref<2x4x256xf32, #tpu.memory_space<vmem>>, vector<2x4x256xf32>
    %c0_2 = arith.constant 0 : index
    %c0_3 = arith.constant 0 : index
    %c0_4 = arith.constant 0 : index
    %1 = vector.load %arg2[%c0_2, %c0_3, %c0_4] : memref<5x4x1xf32, #tpu.memory_space<vmem>>, vector<1x4x1xf32>
    %2 = vector.shape_cast %1 : vector<1x4x1xf32> to vector<4x1xf32>
    %c1 = arith.constant 1 : index
    %c0_5 = arith.constant 0 : index
    %c0_6 = arith.constant 0 : index
    %3 = vector.load %arg2[%c1, %c0_5, %c0_6] : memref<5x4x1xf32, #tpu.memory_space<vmem>>, vector<1x4x1xf32>
    %4 = vector.shape_cast %3 : vector<1x4x1xf32> to vector<4x1xf32>
    %c2 = arith.constant 2 : index
    %c0_7 = arith.constant 0 : index
    %c0_8 = arith.constant 0 : index
    %5 = vector.load %arg2[%c2, %c0_7, %c0_8] : memref<5x4x1xf32, #tpu.memory_space<vmem>>, vector<1x4x1xf32>
    %6 = vector.shape_cast %5 : vector<1x4x1xf32> to vector<4x1xf32>
    %c3 = arith.constant 3 : index
    %c0_9 = arith.constant 0 : index
    %c0_10 = arith.constant 0 : index
    %7 = vector.load %arg2[%c3, %c0_9, %c0_10] : memref<5x4x1xf32, #tpu.memory_space<vmem>>, vector<1x4x1xf32>
    %8 = vector.shape_cast %7 : vector<1x4x1xf32> to vector<4x1xf32>
    %c4 = arith.constant 4 : index
    %c0_11 = arith.constant 0 : index
    %c0_12 = arith.constant 0 : index
    %9 = vector.load %arg2[%c4, %c0_11, %c0_12] : memref<5x4x1xf32, #tpu.memory_space<vmem>>, vector<1x4x1xf32>
    %10 = vector.shape_cast %9 : vector<1x4x1xf32> to vector<4x1xf32>
    %c0_13 = arith.constant 0 : index
    %11 = memref.load %arg3[%c0_13] : memref<3xf32, #tpu.memory_space<smem>>
    %c1_14 = arith.constant 1 : index
    %12 = memref.load %arg3[%c1_14] : memref<3xf32, #tpu.memory_space<smem>>
    %c2_15 = arith.constant 2 : index
    %13 = memref.load %arg3[%c2_15] : memref<3xf32, #tpu.memory_space<smem>>
    %14 = vector.shape_cast %2 : vector<4x1xf32> to vector<1x4x1xf32>
    %15 = vector.broadcast %14 : vector<1x4x1xf32> to vector<2x4x256xf32>
    %16 = arith.mulf %0, %15 : vector<2x4x256xf32>
    %cst = arith.constant dense<0.000000e+00> : vector<2x256xf32>
    %17 = vector.multi_reduction <add>, %16, %cst [1] : vector<2x4x256xf32> to vector<2x256xf32>
    %18 = vector.shape_cast %17 : vector<2x256xf32> to vector<2x1x256xf32>
    %19 = vector.broadcast %11 : f32 to vector<2x1x256xf32>
    %20 = arith.addf %18, %19 : vector<2x1x256xf32>
    %21 = vector.shape_cast %4 : vector<4x1xf32> to vector<1x4x1xf32>
    %22 = vector.broadcast %21 : vector<1x4x1xf32> to vector<2x4x256xf32>
    %23 = arith.mulf %0, %22 : vector<2x4x256xf32>
    %cst_16 = arith.constant dense<0.000000e+00> : vector<2x256xf32>
    %24 = vector.multi_reduction <add>, %23, %cst_16 [1] : vector<2x4x256xf32> to vector<2x256xf32>
    %25 = vector.shape_cast %24 : vector<2x256xf32> to vector<2x1x256xf32>
    %26 = vector.broadcast %12 : f32 to vector<2x1x256xf32>
    %27 = arith.addf %25, %26 : vector<2x1x256xf32>
    %28 = vector.shape_cast %6 : vector<4x1xf32> to vector<1x4x1xf32>
    %29 = vector.broadcast %28 : vector<1x4x1xf32> to vector<2x4x256xf32>
    %30 = arith.mulf %0, %29 : vector<2x4x256xf32>
    %cst_17 = arith.constant dense<0.000000e+00> : vector<2x256xf32>
    %31 = vector.multi_reduction <add>, %30, %cst_17 [1] : vector<2x4x256xf32> to vector<2x256xf32>
    %32 = vector.shape_cast %31 : vector<2x256xf32> to vector<2x1x256xf32>
    %33 = vector.broadcast %13 : f32 to vector<2x1x256xf32>
    %34 = arith.addf %32, %33 : vector<2x1x256xf32>
    %35 = arith.mulf %34, %20 : vector<2x1x256xf32>
    %cst_18 = arith.constant dense<0.000000e+00> : vector<2x1xf32>
    %36 = vector.multi_reduction <add>, %35, %cst_18 [2] : vector<2x1x256xf32> to vector<2x1xf32>
    %37 = vector.shape_cast %36 : vector<2x1xf32> to vector<2x1x1xf32>
    %cst_19 = arith.constant 3.906250e-03 : f32
    %38 = vector.broadcast %cst_19 : f32 to vector<2x1x1xf32>
    %39 = arith.mulf %37, %38 : vector<2x1x1xf32>
    %40 = vector.broadcast %39 : vector<2x1x1xf32> to vector<2x1x256xf32>
    %41 = arith.mulf %27, %40 : vector<2x1x256xf32>
    %42 = vector.shape_cast %8 : vector<4x1xf32> to vector<1x4x1xf32>
    %43 = vector.broadcast %41 : vector<2x1x256xf32> to vector<2x4x256xf32>
    %44 = vector.broadcast %42 : vector<1x4x1xf32> to vector<2x4x256xf32>
    %45 = arith.mulf %43, %44 : vector<2x4x256xf32>
    %46 = vector.shape_cast %10 : vector<4x1xf32> to vector<1x4x1xf32>
    %47 = vector.broadcast %46 : vector<1x4x1xf32> to vector<2x4x256xf32>
    %48 = arith.addf %45, %47 : vector<2x4x256xf32>
    %49 = arith.addf %48, %0 : vector<2x4x256xf32>
    %c0_20 = arith.constant 0 : index
    %c0_21 = arith.constant 0 : index
    %c0_22 = arith.constant 0 : index
    %50 = vector.load %arg4[%c0_20, %c0_21, %c0_22] : memref<2x4x256xf32, #tpu.memory_space<vmem>>, vector<2x4x256xf32>
    tpu.vector_store %arg4[%c0_20, %c0_21, %c0_22], %49 {strides = array<i32>} : memref<2x4x256xf32, #tpu.memory_space<vmem>>, vector<2x4x256xf32>,
    return
  }
  func.func @transform_0(%arg0: i32) -> (i32, i32, i32) {
    %c0_i32 = arith.constant 0 : i32
    %c0_i32_0 = arith.constant 0 : i32
    %c0_i32_1 = arith.constant 0 : i32
    %c0_i32_2 = arith.constant 0 : i32
    return %c0_i32, %c0_i32_0, %c0_i32_1 : i32, i32, i32
  }
  func.func @transform_1(%arg0: i32) -> (i32, i32, i32) {
    %c0_i32 = arith.constant 0 : i32
    %c0_i32_0 = arith.constant 0 : i32
    %c0_i32_1 = arith.constant 0 : i32
    %c0_i32_2 = arith.constant 0 : i32
    return %c0_i32, %c0_i32_0, %c0_i32_1 : i32, i32, i32
  }
  func.func @transform_2(%arg0: i32) -> i32 {
    %c0_i32 = arith.constant 0 : i32
    %c0_i32_0 = arith.constant 0 : i32
    return %c0_i32 : i32
  }
  func.func @transform_3(%arg0: i32) -> (i32, i32, i32) {
    %c0_i32 = arith.constant 0 : i32
    %c0_i32_0 = arith.constant 0 : i32
    %c0_i32_1 = arith.constant 0 : i32
    %c0_i32_2 = arith.constant 0 : i32
    return %c0_i32, %c0_i32_0, %c0_i32_1 : i32, i32, i32
  }
}

</mosaic_0001>

<llo_original>
// kernel: tpu_custom_call.1
$region0: #{tpu_custom_call.1}
  #allocation0 [shape = 'u32[]', space=smem, size = 0x4, offset = 0x4, fixed_abs, tag = 'smem constant byte address 0x4 - core index']
  #allocation1 [shape = 'u32[144,128]{1,0:T(1,128)}', space=vmem, size = 0x12000, scoped, tag = 'internal scratch']
  %s0 = inlined_call_operand.vmem [shape: f32[2,4,256], index: 0, kind: input, shape index: {}]
  %s1 = inlined_call_operand.vmem [shape: f32[5,4,1], index: 1, kind: input, shape index: {}]
  %s2 = inlined_call_operand.vmem [shape: f32[3], index: 2, kind: input, shape index: {}]
  %s3 = inlined_call_operand.hbm [shape: f32[2,4,256], index: 3, kind: output, shape index: {}]
  %s4 = sld [smem:[#allocation0]]
  $region26: #{tpu_custom_call.1} parent=0
    _
  %s6 = ssub.s32 1, %s4
  %s7 = scalar_select 0, %s6, %s4
  $region1: #{tpu_custom_call.1} parent=0
    #allocation2 [shape = 'u8[512]{0}', space=smem, size = 0x200, scoped, tag = 'input window, operand 2, single buffered']
    #allocation3 [shape = 's32[1]{0}', space=sflag, size = 0x4, scoped, tag = 'scoped memory for tpu_custom_call.1']
    #allocation4 [shape = 's32[1]{0}', space=sflag, size = 0x4, scoped, tag = 'scoped memory for tpu_custom_call.1']
    #allocation5 [shape = 'u8[8192]{0}', space=vmem, size = 0x2000, scoped, tag = 'output window, operand 0, single buffered']
    %8 = vsyncpa [#allocation4], 0
    %9 = vsyncpa [#allocation3], 0
    // Predicated region
    $region2: #{tpu_custom_call.1} parent=1 // pred_check
      _
    $region3: #{tpu_custom_call.1} parent=1 // pred_check_branch
      %11 = sbr.rel (0) target = $region5
    $region4: #{tpu_custom_call.1} parent=1 // pred_region
      _
    $region5: #{tpu_custom_call.1} parent=1 // pred_fallthru
      _
    // Predicated region
    $region6: #{tpu_custom_call.1} parent=1 // pred_check
      _
    $region7: #{tpu_custom_call.1} parent=1 // pred_check_branch
      %13 = sbr.rel (0) target = $region9
    $region8: #{tpu_custom_call.1} parent=1 // pred_region
      _
    $region9: #{tpu_custom_call.1} parent=1 // pred_fallthru
      _
    // Predicated region
    $region10: #{tpu_custom_call.1} parent=1 // pred_check
      _
    $region11: #{tpu_custom_call.1} parent=1 // pred_check_branch
      %15 = sbr.rel (0) target = $region13
    $region12: #{tpu_custom_call.1} parent=1 // pred_region
      %s17 = ssub.s32 16, 16
      %18 = vsyncadd [#allocation4], %s17
      %s20 = sshll.u32 %s2, 4
      %s21 = int_to_ptr.vmem [resolvable:$true] %s20
      %23 = dma.vmem_to_smem %s21, 16, [#allocation2], [#allocation4]
    $region13: #{tpu_custom_call.1} parent=1 // pred_fallthru
      _
    // Predicated region
    $region14: #{tpu_custom_call.1} parent=1 // pred_check
      _
    $region15: #{tpu_custom_call.1} parent=1 // pred_check_branch
      %25 = sbr.rel (0) target = $region17
    $region16: #{tpu_custom_call.1} parent=1 // pred_region
      %26 = dma.done [#allocation4], 16
    $region17: #{tpu_custom_call.1} parent=1 // pred_fallthru
      _
    %27 = sfence
    %v28 = vld [vmem:[%s0] sm:$0xff]
    %v29 = vld [vmem:[%s0 + $0x8] sm:$0xff]
    %v30 = vld [vmem:[%s1] sm:$0xf]
    %s31 = scalar_lea.vmem %s1, 4
    %v32 = vld [vmem:[%s31] sm:$0xf]
    %s33 = scalar_lea.vmem %s1, 8
    %v34 = vld [vmem:[%s33] sm:$0xf]
    %s35 = scalar_lea.vmem %s1, 12
    %v36 = vld [vmem:[%s35] sm:$0xf]
    %s37 = scalar_lea.vmem %s1, 16
    %v38 = vld [vmem:[%s37] sm:$0xf]
    %s39 = sld [smem:[#allocation2]]
    %s40 = sld [smem:[#allocation2 + $0x1]]
    %s41 = sld [smem:[#allocation2 + $0x2]]
    %43 = vset.pattern.permute.xlu0 0
    %44 = vperm.xlu0 %43, %v30
    %v45 = vpop.permute.xlu0 %44
    %v47 = vunpack.c.l.s4 839922192
    %v48 = vunpack.c.0.s8 %v47
    %v49 = vlaneseq
    %v50 = vshrl.u32 %v49, 7
    %v51 = vsub.s32 %v48, %v50
    %v52 = vrot.slane %v45, %v51
    %v54 = vmul.f32 %v28, %v52
    %v55 = vmul.f32 %v29, %v52
    %v58 = vcombine.high %v54, %v54
    %v59 = vcombine.high %v55, %v55
    %vm62 = vcmask 1043456
    %v63 = vsel %vm62, %v54, 0.0
    %v64 = vrot.slane %v63, 4
    %v65 = vadd.f32 %v63, %v64
    %v66 = vrot.slane %v65, 2
    %v67 = vadd.f32 %v65, %v66
    %v68 = vrot.slane %v67, 1
    %v69 = vadd.f32 %v67, %v68
    %v70 = vsel %vm62, %v58, 0.0
    %v71 = vrot.slane %v70, 4
    %v72 = vadd.f32 %v70, %v71
    %v73 = vrot.slane %v72, 2
    %v74 = vadd.f32 %v72, %v73
    %v75 = vrot.slane %v74, 1
    %v76 = vadd.f32 %v74, %v75
    %v77 = vsel %vm62, %v55, 0.0
    %v78 = vrot.slane %v77, 4
    %v79 = vadd.f32 %v77, %v78
    %v80 = vrot.slane %v79, 2
    %v81 = vadd.f32 %v79, %v80
    %v82 = vrot.slane %v81, 1
    %v83 = vadd.f32 %v81, %v82
    %v84 = vsel %vm62, %v59, 0.0
    %v85 = vrot.slane %v84, 4
    %v86 = vadd.f32 %v84, %v85
    %v87 = vrot.slane %v86, 2
    %v88 = vadd.f32 %v86, %v87
    %v89 = vrot.slane %v88, 1
    %v90 = vadd.f32 %v88, %v89
    %v91 = vstv %s39
    %v92 = vadd.f32 %v69, %v91
    %v93 = vadd.f32 %v76, %v91
    %v94 = vadd.f32 %v83, %v91
    %v95 = vadd.f32 %v90, %v91
    %97 = vset.pattern.permute.xlu0 0
    %98 = vperm.xlu0 %97, %v32
    %v99 = vpop.permute.xlu0 %98
    %v101 = vunpack.c.l.s4 839922192
    %v102 = vunpack.c.0.s8 %v101
    %v103 = vlaneseq
    %v104 = vshrl.u32 %v103, 7
    %v105 = vsub.s32 %v102, %v104
    %v106 = vrot.slane %v99, %v105
    %v108 = vmul.f32 %v28, %v106
    %v109 = vmul.f32 %v29, %v106
    %v112 = vcombine.high %v108, %v108
    %v113 = vcombine.high %v109, %v109
    %v116 = vsel %vm62, %v108, 0.0
    %v117 = vrot.slane %v116, 4
    %v118 = vadd.f32 %v116, %v117
    %v119 = vrot.slane %v118, 2
    %v120 = vadd.f32 %v118, %v119
    %v121 = vrot.slane %v120, 1
    %v122 = vadd.f32 %v120, %v121
    %v123 = vsel %vm62, %v112, 0.0
    %v124 = vrot.slane %v123, 4
    %v125 = vadd.f32 %v123, %v124
    %v126 = vrot.slane %v125, 2
    %v127 = vadd.f32 %v125, %v126
    %v128 = vrot.slane %v127, 1
    %v129 = vadd.f32 %v127, %v128
    %v130 = vsel %vm62, %v109, 0.0
    %v131 = vrot.slane %v130, 4
    %v132 = vadd.f32 %v130, %v131
    %v133 = vrot.slane %v132, 2
    %v134 = vadd.f32 %v132, %v133
    %v135 = vrot.slane %v134, 1
    %v136 = vadd.f32 %v134, %v135
    %v137 = vsel %vm62, %v113, 0.0
    %v138 = vrot.slane %v137, 4
    %v139 = vadd.f32 %v137, %v138
    %v140 = vrot.slane %v139, 2
    %v141 = vadd.f32 %v139, %v140
    %v142 = vrot.slane %v141, 1
    %v143 = vadd.f32 %v141, %v142
    %v144 = vstv %s40
    %v145 = vadd.f32 %v122, %v144
    %v146 = vadd.f32 %v129, %v144
    %v147 = vadd.f32 %v136, %v144
    %v148 = vadd.f32 %v143, %v144
    %150 = vset.pattern.permute.xlu0 0
    %151 = vperm.xlu0 %150, %v34
    %v152 = vpop.permute.xlu0 %151
    %v154 = vunpack.c.l.s4 839922192
    %v155 = vunpack.c.0.s8 %v154
    %v156 = vlaneseq
    %v157 = vshrl.u32 %v156, 7
    %v158 = vsub.s32 %v155, %v157
    %v159 = vrot.slane %v152, %v158
    %v161 = vmul.f32 %v28, %v159
    %v162 = vmul.f32 %v29, %v159
    %v165 = vcombine.high %v161, %v161
    %v166 = vcombine.high %v162, %v162
    %v169 = vsel %vm62, %v161, 0.0
    %v170 = vrot.slane %v169, 4
    %v171 = vadd.f32 %v169, %v170
    %v172 = vrot.slane %v171, 2
    %v173 = vadd.f32 %v171, %v172
    %v174 = vrot.slane %v173, 1
    %v175 = vadd.f32 %v173, %v174
    %v176 = vsel %vm62, %v165, 0.0
    %v177 = vrot.slane %v176, 4
    %v178 = vadd.f32 %v176, %v177
    %v179 = vrot.slane %v178, 2
    %v180 = vadd.f32 %v178, %v179
    %v181 = vrot.slane %v180, 1
    %v182 = vadd.f32 %v180, %v181
    %v183 = vsel %vm62, %v162, 0.0
    %v184 = vrot.slane %v183, 4
    %v185 = vadd.f32 %v183, %v184
    %v186 = vrot.slane %v185, 2
    %v187 = vadd.f32 %v185, %v186
    %v188 = vrot.slane %v187, 1
    %v189 = vadd.f32 %v187, %v188
    %v190 = vsel %vm62, %v166, 0.0
    %v191 = vrot.slane %v190, 4
    %v192 = vadd.f32 %v190, %v191
    %v193 = vrot.slane %v192, 2
    %v194 = vadd.f32 %v192, %v193
    %v195 = vrot.slane %v194, 1
    %v196 = vadd.f32 %v194, %v195
    %v197 = vstv %s41
    %v198 = vadd.f32 %v175, %v197
    %v199 = vadd.f32 %v182, %v197
    %v200 = vadd.f32 %v189, %v197
    %v201 = vadd.f32 %v196, %v197
    %v202 = vmul.f32 %v198, %v92
    %v203 = vmul.f32 %v199, %v93
    %v204 = vmul.f32 %v200, %v94
    %v205 = vmul.f32 %v201, %v95
    %v206 = vadd.f32 %v202, %v203
    %207 = vadd.xlane.f32.xlu0 %v206
    %v208 = vpop.xlane.xlu0 %207
    %v209 = vadd.f32 %v204, %v205
    %210 = vadd.xlane.f32.xlu0 %v209
    %v211 = vpop.xlane.xlu0 %210
    %v212 = vmul.f32 %v208, 0.00390625
    %v213 = vmul.f32 %v211, 0.00390625
    %v214 = vmul.f32 %v145, %v212
    %v215 = vmul.f32 %v146, %v212
    %v216 = vmul.f32 %v147, %v213
    %v217 = vmul.f32 %v148, %v213
    %219 = vset.pattern.permute.xlu0 0
    %220 = vperm.xlu0 %219, %v36
    %v221 = vpop.permute.xlu0 %220
    %v223 = vmul.f32 %v214, %v221
    %v224 = vmul.f32 %v215, %v221
    %v225 = vmul.f32 %v216, %v221
    %v226 = vmul.f32 %v217, %v221
    %228 = vset.pattern.permute.xlu0 0
    %229 = vperm.xlu0 %228, %v38
    %v230 = vpop.permute.xlu0 %229
    %v232 = vadd.f32 %v223, %v230
    %v233 = vadd.f32 %v224, %v230
    %v234 = vadd.f32 %v225, %v230
    %v235 = vadd.f32 %v226, %v230
    %v238 = vcombine.high %v28, %v28
    %v239 = vcombine.high %v29, %v29
    %v242 = vadd.f32 %v232, %v28
    %v243 = vadd.f32 %v233, %v238
    %v244 = vadd.f32 %v234, %v29
    %v245 = vadd.f32 %v235, %v239
    %v250 = vcombine.low %v242, %v243
    %v251 = vcombine.low %v244, %v245
    %254 = vst [vmem:[#allocation5] sm:$0xff] %v250
    %255 = vst [vmem:[#allocation5 + $0x8] sm:$0xff] %v251
    // Predicated region
    $region18: #{tpu_custom_call.1} parent=1 // pred_check
      _
    $region19: #{tpu_custom_call.1} parent=1 // pred_check_branch
      %257 = sbr.rel (0) target = $region21
    $region20: #{tpu_custom_call.1} parent=1 // pred_region
      %s259 = ssub.s32 256, 256
      %260 = vsyncadd [#allocation3], %s259
      %s261 = sshll.u32 [#allocation5], 4
      %s262 = int_to_ptr.vmem [resolvable:$true] %s261
      %267 = dma.vmem_to_hbm [thread:$0]  %s262, 256, %s3, [#allocation3], 128, 128, 8
    $region21: #{tpu_custom_call.1} parent=1 // pred_fallthru
      _
    // Predicated region
    $region22: #{tpu_custom_call.1} parent=1 // pred_check
      _
    $region23: #{tpu_custom_call.1} parent=1 // pred_check_branch
      %269 = sbr.rel (0) target = $region25
    $region24: #{tpu_custom_call.1} parent=1 // pred_region
      %270 = dma.done [#allocation3], 256
    $region25: #{tpu_custom_call.1} parent=1 // pred_fallthru
      _
    %271 = vsyncpa [#allocation3], 1
    %272 = vsyncpa [#allocation4], 1

</llo_original>
